<compile_context>
chip_gen: v5e
topology: v5e:2x2
jax: 0.10.0
libtpu: 0.0.40
codegen_flags: <defaults>
</compile_context>

<pallas_src>
import jax
import jax.numpy as jnp
from jax.experimental import pallas as pl
from jax.experimental.pallas import tpu as pltpu


def _qensembles_kernel(xa_ref, w1_ref, b12_ref, w2_ref, w3_ref, b3_ref, out_ref):
    num = w2_ref.shape[0]
    H = w2_ref.shape[1]

    xa = xa_ref[...]                                     # (B, OBS+ACT) bf16

    # fc1: one MXU pass for all ensemble members (N fused to num*H, K fused
    # over obs+act).  f32 accumulation via preferred_element_type.
    h1_all = jnp.dot(xa, w1_ref[...], preferred_element_type=jnp.float32)
    h1_all = jnp.maximum(h1_all + b12_ref[0:1, :], 0.0)  # (B, num*H) f32

    qs = []
    for e in range(num):                                 # static unroll (num tiny)
        h1 = h1_all[:, e * H:(e + 1) * H]                # 256-aligned lane slice
        # fc2: bf16 into the MXU, f32 accumulate, f32 elementwise.
        h2 = (jnp.dot(h1.astype(w2_ref.dtype), w2_ref[e],
                      preferred_element_type=jnp.float32)
              + b12_ref[1:2, e * H:(e + 1) * H])
        h2 = jnp.maximum(h2, 0.0)                        # (B, H) f32
        # fc3 as VPU multiply + cross-lane reduction (w3 stored as (1, H));
        # b3 is a per-member scalar read from SMEM.
        q = (jnp.sum(h2 * w3_ref[e].astype(jnp.float32), axis=-1, keepdims=True)
             + b3_ref[e])                                # (B, 1) f32
        qs.append(q)

    inv_n = 1.0 / float(num)
    mean = qs[0]
    for q in qs[1:]:
        mean = mean + q
    mean = mean * inv_n

    # Unbiased (ddof=1) variance from centered residuals (numerically safe;
    # matches torch.std).  num >= 2 is guaranteed by the wrapper.
    var = (qs[0] - mean) * (qs[0] - mean)
    for q in qs[1:]:
        var = var + (q - mean) * (q - mean)
    var = var * (1.0 / (float(num) - 1.0))

    # Single lane-packed output: column 0 = mean, column 1 = std.
    out_ref[...] = jnp.concatenate([mean, jnp.sqrt(var)], axis=-1)


def qensembles_forward(x, a, params, *, compute_dtype=jnp.bfloat16):
    """x: (B, obs), a: (B, act). params: stacked ensemble weights (f32 masters)."""
    num, obs_dim, H = params["w1x"].shape
    act_dim = params["w1a"].shape[1]
    if num < 2:
        raise ValueError("QEnsembles std uses ddof=1; num >= 2 is required.")
    B = x.shape[0]
    in_dim = obs_dim + act_dim

    # Wrapper-side concat of the two tiny inputs; bf16 at the MXU boundary.
    xa = jnp.concatenate([x, a], axis=1).astype(compute_dtype)          # (B, IN)

    # fc1 weights fused along K (obs+act) and along N (ensemble members):
    #   w1_fused[:, e*H:(e+1)*H] == concat([w1x[e], w1a[e]], axis=0)
    # (in real training this prep would be done once at param-update time.)
    w1_full = jnp.concatenate([params["w1x"], params["w1a"]], axis=1)   # (num, IN, H)
    w1_fused = jnp.transpose(w1_full, (1, 0, 2)).reshape(in_dim, num * H)
    w1_fused = w1_fused.astype(compute_dtype)

    # Biases packed into one f32 array: row 0 = b1 (all members), row 1 = b2.
    b12 = jnp.concatenate([params["b1"].reshape(1, num * H),
                           params["b2"].reshape(1, num * H)],
                          axis=0).astype(jnp.float32)                   # (2, num*H)

    w2 = params["w2"].astype(compute_dtype)                             # (num, H, H)
    w3 = params["w3"].astype(compute_dtype)                             # (num, 1, H)
    b3 = params["b3"].reshape(num).astype(jnp.float32)                  # (num,) SMEM

    vmem = pl.BlockSpec(memory_space=pltpu.MemorySpace.VMEM)
    smem = pl.BlockSpec(memory_space=pltpu.MemorySpace.SMEM)

    flops = (2 * B * in_dim * num * H          # fused fc1
             + 2 * num * B * H * H             # fc2 per member
             + 2 * num * B * H)                # fc3 multiply-reduce
    bytes_accessed = (xa.size * 2 + w1_fused.size * 2 + w2.size * 2
                      + w3.size * 2 + b12.size * 4 + b3.size * 4 + B * 2 * 4)

    out = pl.pallas_call(
        _qensembles_kernel,
        out_shape=jax.ShapeDtypeStruct((B, 2), jnp.float32),
        in_specs=[vmem, vmem, vmem, vmem, vmem, smem],
        out_specs=vmem,
        cost_estimate=pl.CostEstimate(flops=flops, transcendentals=0,
                                      bytes_accessed=bytes_accessed),
    )(xa, w1_fused, b12, w2, w3, b3)

    return out[:, 0:1], out[:, 1:2]


def init_params(key, num, obs_dim, act_dim, hidden):
    ks = jax.random.split(key, 7)
    in_dim = obs_dim + act_dim
    s1 = 1.0 / jnp.sqrt(in_dim)
    s2 = 1.0 / jnp.sqrt(hidden)
    return {
        "w1x": jax.random.uniform(ks[0], (num, obs_dim, hidden), jnp.float32, -s1, s1),
        "w1a": jax.random.uniform(ks[1], (num, act_dim, hidden), jnp.float32, -s1, s1),
        "b1":  jax.random.uniform(ks[2], (num, 1, hidden), jnp.float32, -s1, s1),
        "w2":  jax.random.uniform(ks[3], (num, hidden, hidden), jnp.float32, -s2, s2),
        "b2":  jax.random.uniform(ks[4], (num, 1, hidden), jnp.float32, -s2, s2),
        "w3":  jax.random.uniform(ks[5], (num, 1, hidden), jnp.float32, -s2, s2),
        "b3":  jax.random.uniform(ks[6], (num, 1, 1), jnp.float32, -s2, s2),
    }


def reference_forward(x, a, params, *, compute_dtype=jnp.bfloat16):
    """Pure-JAX reference mirroring the kernel's mixed-precision recipe."""
    xa = jnp.concatenate([x, a], axis=1).astype(compute_dtype)

    def one(w1x, w1a, b1, w2, b2, w3, b3):
        w1 = jnp.concatenate([w1x, w1a], axis=0).astype(compute_dtype)
        h1 = jnp.maximum(
            jnp.dot(xa, w1, preferred_element_type=jnp.float32) + b1, 0.0)
        h2 = jnp.maximum(
            jnp.dot(h1.astype(compute_dtype), w2.astype(compute_dtype),
                    preferred_element_type=jnp.float32) + b2, 0.0)
        return jnp.sum(h2 * w3.astype(compute_dtype).astype(jnp.float32),
                       axis=-1, keepdims=True) + b3

    qs = jax.vmap(one)(params["w1x"], params["w1a"], params["b1"],
                       params["w2"], params["b2"], params["w3"], params["b3"])
    return qs.mean(axis=0), jnp.std(qs, axis=0, ddof=1)


if __name__ == "__main__":
    key = jax.random.PRNGKey(0)
    k_x, k_a, k_p = jax.random.split(key, 3)

    B, OBS, ACT, HIDDEN, NUM = 8, 16, 4, 256, 2
    x = jax.random.normal(k_x, (B, OBS), dtype=jnp.float32)
    a = jax.random.normal(k_a, (B, ACT), dtype=jnp.float32)
    params = init_params(k_p, NUM, OBS, ACT, HIDDEN)

    mean, std = qensembles_forward(x, a, params)
    jax.block_until_ready((mean, std))

    ref_mean, ref_std = reference_forward(x, a, params)
    assert mean.shape == (B, 1) and std.shape == (B, 1)
    assert jnp.allclose(mean, ref_mean, atol=5e-3, rtol=5e-3)
    assert jnp.allclose(std, ref_std, atol=5e-3, rtol=5e-3)

    print("KERNEL_OK")
</pallas_src>

<mosaic_0001>
module attributes {stable_mosaic.version = 11 : i64} {
  func.func @_qensembles_kernel(%arg0: memref<8x20xbf16, #tpu.memory_space<vmem>>, %arg1: memref<20x512xbf16, #tpu.memory_space<vmem>>, %arg2: memref<2x512xf32, #tpu.memory_space<vmem>>, %arg3: memref<2x256x256xbf16, #tpu.memory_space<vmem>>, %arg4: memref<2x1x256xbf16, #tpu.memory_space<vmem>>, %arg5: memref<2xf32, #tpu.memory_space<smem>>, %arg6: memref<8x2xf32, #tpu.memory_space<vmem>>) attributes {dimension_semantics = [], scalar_prefetch = 0 : i64, scratch_operands = 0 : i64, tpu.core_type = #tpu.core_type<tc>} {
    %c0 = arith.constant 0 : index
    %c0_0 = arith.constant 0 : index
    %0 = vector.load %arg0[%c0, %c0_0] : memref<8x20xbf16, #tpu.memory_space<vmem>>, vector<8x20xbf16>
    %c0_1 = arith.constant 0 : index
    %c0_2 = arith.constant 0 : index
    %1 = vector.load %arg1[%c0_1, %c0_2] : memref<20x512xbf16, #tpu.memory_space<vmem>>, vector<20x512xbf16>
    %cst = arith.constant dense<0.000000e+00> : vector<8x512xf32>
    %2 = tpu.matmul %0, %1, %cst {dimension_numbers = #tpu.dot_dimension_numbers<[1], [0], [0], [1], [0, 0, 1, 1], [], []>} : vector<8x20xbf16>, vector<20x512xbf16>, vector<8x512xf32> -> vector<8x512xf32>
    %c0_3 = arith.constant 0 : index
    %c0_4 = arith.constant 0 : index
    %3 = vector.load %arg2[%c0_3, %c0_4] : memref<2x512xf32, #tpu.memory_space<vmem>>, vector<1x512xf32>
    %4 = vector.broadcast %3 : vector<1x512xf32> to vector<8x512xf32>
    %5 = arith.addf %2, %4 : vector<8x512xf32>
    %cst_5 = arith.constant 0.000000e+00 : f32
    %6 = vector.broadcast %cst_5 : f32 to vector<8x512xf32>
    %7 = arith.maximumf %5, %6 : vector<8x512xf32>
    %8 = vector.extract_strided_slice %7 {offsets = [0, 0], sizes = [8, 256], strides = [1, 1]} : vector<8x512xf32> to vector<8x256xf32>
    %9 = arith.truncf %8 : vector<8x256xf32> to vector<8x256xbf16>
    %c0_6 = arith.constant 0 : index
    %c0_7 = arith.constant 0 : index
    %c0_8 = arith.constant 0 : index
    %10 = vector.load %arg3[%c0_6, %c0_7, %c0_8] : memref<2x256x256xbf16, #tpu.memory_space<vmem>>, vector<1x256x256xbf16>
    %11 = vector.shape_cast %10 : vector<1x256x256xbf16> to vector<256x256xbf16>
    %cst_9 = arith.constant dense<0.000000e+00> : vector<8x256xf32>
    %12 = tpu.matmul %9, %11, %cst_9 {dimension_numbers = #tpu.dot_dimension_numbers<[1], [0], [0], [1], [0, 0, 1, 1], [], []>} : vector<8x256xbf16>, vector<256x256xbf16>, vector<8x256xf32> -> vector<8x256xf32>
    %c1 = arith.constant 1 : index
    %c0_10 = arith.constant 0 : index
    %13 = vector.load %arg2[%c1, %c0_10] : memref<2x512xf32, #tpu.memory_space<vmem>>, vector<1x256xf32>
    %14 = vector.broadcast %13 : vector<1x256xf32> to vector<8x256xf32>
    %15 = arith.addf %12, %14 : vector<8x256xf32>
    %cst_11 = arith.constant 0.000000e+00 : f32
    %16 = vector.broadcast %cst_11 : f32 to vector<8x256xf32>
    %17 = arith.maximumf %15, %16 : vector<8x256xf32>
    %c0_12 = arith.constant 0 : index
    %c0_13 = arith.constant 0 : index
    %c0_14 = arith.constant 0 : index
    %18 = vector.load %arg4[%c0_12, %c0_13, %c0_14] : memref<2x1x256xbf16, #tpu.memory_space<vmem>>, vector<1x1x256xbf16>
    %19 = vector.shape_cast %18 : vector<1x1x256xbf16> to vector<1x256xbf16>
    %20 = arith.extf %19 : vector<1x256xbf16> to vector<1x256xf32>
    %21 = vector.broadcast %20 : vector<1x256xf32> to vector<8x256xf32>
    %22 = arith.mulf %17, %21 : vector<8x256xf32>
    %cst_15 = arith.constant dense<0.000000e+00> : vector<8xf32>
    %23 = vector.multi_reduction <add>, %22, %cst_15 [1] : vector<8x256xf32> to vector<8xf32>
    %24 = vector.shape_cast %23 : vector<8xf32> to vector<8x1xf32>
    %c0_16 = arith.constant 0 : index
    %25 = memref.load %arg5[%c0_16] : memref<2xf32, #tpu.memory_space<smem>>
    %26 = vector.broadcast %25 : f32 to vector<8x1xf32>
    %27 = arith.addf %24, %26 : vector<8x1xf32>
    %28 = vector.extract_strided_slice %7 {offsets = [0, 256], sizes = [8, 256], strides = [1, 1]} : vector<8x512xf32> to vector<8x256xf32>
    %29 = arith.truncf %28 : vector<8x256xf32> to vector<8x256xbf16>
    %c1_17 = arith.constant 1 : index
    %c0_18 = arith.constant 0 : index
    %c0_19 = arith.constant 0 : index
    %30 = vector.load %arg3[%c1_17, %c0_18, %c0_19] : memref<2x256x256xbf16, #tpu.memory_space<vmem>>, vector<1x256x256xbf16>
    %31 = vector.shape_cast %30 : vector<1x256x256xbf16> to vector<256x256xbf16>
    %cst_20 = arith.constant dense<0.000000e+00> : vector<8x256xf32>
    %32 = tpu.matmul %29, %31, %cst_20 {dimension_numbers = #tpu.dot_dimension_numbers<[1], [0], [0], [1], [0, 0, 1, 1], [], []>} : vector<8x256xbf16>, vector<256x256xbf16>, vector<8x256xf32> -> vector<8x256xf32>
    %c1_21 = arith.constant 1 : index
    %c256 = arith.constant 256 : index
    %33 = vector.load %arg2[%c1_21, %c256] : memref<2x512xf32, #tpu.memory_space<vmem>>, vector<1x256xf32>
    %34 = vector.broadcast %33 : vector<1x256xf32> to vector<8x256xf32>
    %35 = arith.addf %32, %34 : vector<8x256xf32>
    %cst_22 = arith.constant 0.000000e+00 : f32
    %36 = vector.broadcast %cst_22 : f32 to vector<8x256xf32>
    %37 = arith.maximumf %35, %36 : vector<8x256xf32>
    %c1_23 = arith.constant 1 : index
    %c0_24 = arith.constant 0 : index
    %c0_25 = arith.constant 0 : index
    %38 = vector.load %arg4[%c1_23, %c0_24, %c0_25] : memref<2x1x256xbf16, #tpu.memory_space<vmem>>, vector<1x1x256xbf16>
    %39 = vector.shape_cast %38 : vector<1x1x256xbf16> to vector<1x256xbf16>
    %40 = arith.extf %39 : vector<1x256xbf16> to vector<1x256xf32>
    %41 = vector.broadcast %40 : vector<1x256xf32> to vector<8x256xf32>
    %42 = arith.mulf %37, %41 : vector<8x256xf32>
    %cst_26 = arith.constant dense<0.000000e+00> : vector<8xf32>
    %43 = vector.multi_reduction <add>, %42, %cst_26 [1] : vector<8x256xf32> to vector<8xf32>
    %44 = vector.shape_cast %43 : vector<8xf32> to vector<8x1xf32>
    %c1_27 = arith.constant 1 : index
    %45 = memref.load %arg5[%c1_27] : memref<2xf32, #tpu.memory_space<smem>>
    %46 = vector.broadcast %45 : f32 to vector<8x1xf32>
    %47 = arith.addf %44, %46 : vector<8x1xf32>
    %48 = arith.addf %27, %47 : vector<8x1xf32>
    %cst_28 = arith.constant 5.000000e-01 : f32
    %49 = vector.broadcast %cst_28 : f32 to vector<8x1xf32>
    %50 = arith.mulf %48, %49 : vector<8x1xf32>
    %51 = arith.subf %27, %50 : vector<8x1xf32>
    %52 = arith.subf %27, %50 : vector<8x1xf32>
    %53 = arith.mulf %51, %52 : vector<8x1xf32>
    %54 = arith.subf %47, %50 : vector<8x1xf32>
    %55 = arith.subf %47, %50 : vector<8x1xf32>
    %56 = arith.mulf %54, %55 : vector<8x1xf32>
    %57 = arith.addf %53, %56 : vector<8x1xf32>
    %cst_29 = arith.constant 1.000000e+00 : f32
    %58 = vector.broadcast %cst_29 : f32 to vector<8x1xf32>
    %59 = arith.mulf %57, %58 : vector<8x1xf32>
    %60 = math.sqrt %59 : vector<8x1xf32>
    %61 = tpu.concatenate %50, %60 in 1 : vector<8x1xf32>, vector<8x1xf32> -> vector<8x2xf32>
    %c0_30 = arith.constant 0 : index
    %c0_31 = arith.constant 0 : index
    %62 = vector.load %arg6[%c0_30, %c0_31] : memref<8x2xf32, #tpu.memory_space<vmem>>, vector<8x2xf32>
    tpu.vector_store %arg6[%c0_30, %c0_31], %61 {strides = array<i32>} : memref<8x2xf32, #tpu.memory_space<vmem>>, vector<8x2xf32>,
    return
  }
}

</mosaic_0001>

<llo_original>
// kernel: tpu_custom_call.1
$region0: #{tpu_custom_call.1}
  #allocation0 [shape = 'u32[]', space=smem, size = 0x4, offset = 0x4, fixed_abs, tag = 'smem constant byte address 0x4 - core index']
  #allocation1 [shape = 'u32[72,128]{1,0:T(1,128)}', space=vmem, size = 0x9000, scoped, tag = 'internal scratch']
  %s0 = inlined_call_operand.vmem [shape: bf16[8,20], index: 0, kind: input, shape index: {}]
  %s1 = inlined_call_operand.hbm [shape: bf16[20,512], index: 1, kind: input, shape index: {}]
  %s2 = inlined_call_operand.hbm [shape: f32[2,512], index: 2, kind: input, shape index: {}]
  %s3 = inlined_call_operand.hbm [shape: bf16[2,256,256], index: 3, kind: input, shape index: {}]
  %s4 = inlined_call_operand.vmem [shape: bf16[2,1,256], index: 4, kind: input, shape index: {}]
  %s5 = inlined_call_operand.vmem [shape: f32[2], index: 5, kind: input, shape index: {}]
  %s6 = inlined_call_operand.vmem [shape: f32[8,2], index: 6, kind: output, shape index: {}]
  %s7 = sld [smem:[#allocation0]]
  $region50: #{tpu_custom_call.1} parent=0
    _
  %s9 = ssub.s32 1, %s7
  %s10 = scalar_select 0, %s9, %s7
  $region1: #{tpu_custom_call.1} parent=0
    #allocation2 [shape = 'u8[24576]{0}', space=vmem, size = 0x6000, scoped, tag = 'input window, operand 1, single buffered']
    #allocation3 [shape = 's32[1]{0}', space=sflag, size = 0x4, scoped, tag = 'scoped memory for tpu_custom_call.1']
    #allocation4 [shape = 's32[1]{0}', space=sflag, size = 0x4, scoped, tag = 'scoped memory for tpu_custom_call.1']
    #allocation5 [shape = 'u8[4096]{0}', space=vmem, size = 0x1000, scoped, tag = 'input window, operand 2, single buffered']
    #allocation6 [shape = 's32[1]{0}', space=sflag, size = 0x4, scoped, tag = 'scoped memory for tpu_custom_call.1']
    #allocation7 [shape = 'u8[262144]{0}', space=vmem, size = 0x40000, scoped, tag = 'input window, operand 3, single buffered']
    #allocation8 [shape = 'u8[512]{0}', space=smem, size = 0x200, scoped, tag = 'input window, operand 5, single buffered']
    %11 = vsyncpa [#allocation3], 0
    %12 = vsyncpa [#allocation6], 0
    %13 = vsyncpa [#allocation4], 0
    // Predicated region
    $region2: #{tpu_custom_call.1} parent=1 // pred_check
      _
    $region3: #{tpu_custom_call.1} parent=1 // pred_check_branch
      %15 = sbr.rel (0) target = $region5
    $region4: #{tpu_custom_call.1} parent=1 // pred_region
      _
    $region5: #{tpu_custom_call.1} parent=1 // pred_fallthru
      _
    // Predicated region
    $region6: #{tpu_custom_call.1} parent=1 // pred_check
      _
    $region7: #{tpu_custom_call.1} parent=1 // pred_check_branch
      %17 = sbr.rel (0) target = $region9
    $region8: #{tpu_custom_call.1} parent=1 // pred_region
      %19 = vsyncadd [#allocation3], 0
      %s20 = sshll.u32 %s1, 4
      %s21 = int_to_ptr.hbm [resolvable:$true] %s20
      %s22 = sshll.u32 [#allocation2], 4
      %s23 = int_to_ptr.vmem [resolvable:$true] %s22
      %28 = dma.hbm_to_vmem [thread:$0]  %s21, 768, %s23, [#allocation3], 256, 256, 16
    $region9: #{tpu_custom_call.1} parent=1 // pred_fallthru
      _
    // Predicated region
    $region10: #{tpu_custom_call.1} parent=1 // pred_check
      _
    $region11: #{tpu_custom_call.1} parent=1 // pred_check_branch
      %30 = sbr.rel (0) target = $region13
    $region12: #{tpu_custom_call.1} parent=1 // pred_region
      %32 = vsyncadd [#allocation6], 0
      %s34 = sshll.u32 %s2, 4
      %s35 = int_to_ptr.hbm [resolvable:$true] %s34
      %s36 = sshll.u32 [#allocation5], 4
      %s37 = int_to_ptr.vmem [resolvable:$true] %s36
      %39 = dma.hbm_to_vmem [thread:$0]  %s35, 128, %s37, [#allocation6]
    $region13: #{tpu_custom_call.1} parent=1 // pred_fallthru
      _
    // Predicated region
    $region14: #{tpu_custom_call.1} parent=1 // pred_check
      _
    $region15: #{tpu_custom_call.1} parent=1 // pred_check_branch
      %41 = sbr.rel (0) target = $region17
    $region16: #{tpu_custom_call.1} parent=1 // pred_region
      %43 = vsyncadd [#allocation6], 0
      %s44 = sshll.u32 %s3, 4
      %s45 = int_to_ptr.hbm [resolvable:$true] %s44
      %s46 = sshll.u32 [#allocation7], 4
      %s47 = int_to_ptr.vmem [resolvable:$true] %s46
      %52 = dma.hbm_to_vmem [thread:$0]  %s45, 8192, %s47, [#allocation6], 128, 128, 8
    $region17: #{tpu_custom_call.1} parent=1 // pred_fallthru
      _
    // Predicated region
    $region18: #{tpu_custom_call.1} parent=1 // pred_check
      _
    $region19: #{tpu_custom_call.1} parent=1 // pred_check_branch
      %54 = sbr.rel (0) target = $region21
    $region20: #{tpu_custom_call.1} parent=1 // pred_region
      _
    $region21: #{tpu_custom_call.1} parent=1 // pred_fallthru
      _
    // Predicated region
    $region22: #{tpu_custom_call.1} parent=1 // pred_check
      _
    $region23: #{tpu_custom_call.1} parent=1 // pred_check_branch
      %56 = sbr.rel (0) target = $region25
    $region24: #{tpu_custom_call.1} parent=1 // pred_region
      %58 = vsyncadd [#allocation4], 0
      %s60 = sshll.u32 %s5, 4
      %s61 = int_to_ptr.vmem [resolvable:$true] %s60
      %63 = dma.vmem_to_smem %s61, 16, [#allocation8], [#allocation4]
    $region25: #{tpu_custom_call.1} parent=1 // pred_fallthru
      _
    // Predicated region
    $region26: #{tpu_custom_call.1} parent=1 // pred_check
      _
    $region27: #{tpu_custom_call.1} parent=1 // pred_check_branch
      %65 = sbr.rel (0) target = $region29
    $region28: #{tpu_custom_call.1} parent=1 // pred_region
      %67 = dma.done [#allocation3], 768
    $region29: #{tpu_custom_call.1} parent=1 // pred_fallthru
      _
    // Predicated region
    $region30: #{tpu_custom_call.1} parent=1 // pred_check
      _
    $region31: #{tpu_custom_call.1} parent=1 // pred_check_branch
      %69 = sbr.rel (0) target = $region33
    $region32: #{tpu_custom_call.1} parent=1 // pred_region
      %71 = dma.done [#allocation6], 128
    $region33: #{tpu_custom_call.1} parent=1 // pred_fallthru
      _
    // Predicated region
    $region34: #{tpu_custom_call.1} parent=1 // pred_check
      _
    $region35: #{tpu_custom_call.1} parent=1 // pred_check_branch
      %73 = sbr.rel (0) target = $region37
    $region36: #{tpu_custom_call.1} parent=1 // pred_region
      %75 = dma.done [#allocation6], 8192
    $region37: #{tpu_custom_call.1} parent=1 // pred_fallthru
      _
    // Predicated region
    $region38: #{tpu_custom_call.1} parent=1 // pred_check
      _
    $region39: #{tpu_custom_call.1} parent=1 // pred_check_branch
      %77 = sbr.rel (0) target = $region41
    $region40: #{tpu_custom_call.1} parent=1 // pred_region
      %79 = dma.done [#allocation4], 16
    $region41: #{tpu_custom_call.1} parent=1 // pred_fallthru
      _
    %80 = sfence
    %v82 = vld [vmem:[%s0] sm:$0xf]
    %v83 = vld [vmem:[#allocation2] sm:$0xff]
    %v84 = vld [vmem:[#allocation2 + $0x8] sm:$0xff]
    %v85 = vld [vmem:[#allocation2 + $0x10] sm:$0xff]
    %v86 = vld [vmem:[#allocation2 + $0x18] sm:$0xff]
    %v87 = vld [vmem:[#allocation2 + $0x20] sm:$0x33]
    %v88 = vld [vmem:[#allocation2 + $0x28] sm:$0x33]
    %v89 = vld [vmem:[#allocation5] ss:$2 sm:$0xf]
    %v91 = vperm.slane %v89, 0
    %v92 = vperm.slane %v89, 1
    %v93 = vperm.slane %v89, 2
    %v94 = vperm.slane %v89, 3
    %v105 = vunpack.c.l.b16 %v83
    %v106 = vunpack.c.h.b16 %v83
    %v107 = vunpack.c.l.b16 %v84
    %v108 = vunpack.c.h.b16 %v84
    %v109 = vunpack.c.l.b16 %v85
    %v110 = vunpack.c.h.b16 %v85
    %v111 = vunpack.c.l.b16 %v86
    %v112 = vunpack.c.h.b16 %v86
    %v113 = vunpack.c.l.b16 %v87
    %v114 = vunpack.c.h.b16 %v87
    %v115 = vunpack.c.l.b16 %v88
    %v116 = vunpack.c.h.b16 %v88
    %v117 = vpack.c.b16 %v109, %v105
    %v118 = vpack.c.b16 %v110, %v106
    %v119 = vpack.c.b16 %v111, %v107
    %v120 = vpack.c.b16 %v112, %v108
    %v121 = vpack.c.b16 %v113, %v113
    %v122 = vpack.c.b16 %v114, %v114
    %v123 = vpack.c.b16 %v115, %v115
    %v124 = vpack.c.b16 %v116, %v116
    %vm129 = vcmask 162816
    %v131 = vsel %vm129, %v82, 0
    %vm133 = vcmask 1041408
    %v135 = vsel %vm133, %v121, 0
    %v138 = vsel %vm133, %v122, 0
    %v141 = vsel %vm133, %v123, 0
    %v144 = vsel %vm133, %v124, 0
    %146 = vmatpush.bf16.msra.mxu0 0
    %147 = vmatpush.bf16.msra.mxu0 0
    %148 = vmatpush.bf16.msra.mxu0 0
    %149 = vmatpush.bf16.msra.mxu0 0
    %150 = vmatpush.bf16.msra.mxu0 0
    %151 = vmatpush.bf16.msra.mxu0 0
    %152 = vmatpush.bf16.msra.mxu0 %v135
    %153 = vmatpush.bf16.msra.mxu0 %v117
    %154 = vmatmul.bf16.gmra.mxu0 %v131
    %v155 = vpop.f32.mrf.mxu0
    %v156 = vadd.f32 %v91, %v155
    %v157 = vpop.f32.mrf.mxu0
    %158 = vdwg.mxu0
    %159 = vmatpush.bf16.msra.mxu0 0
    %160 = vmatpush.bf16.msra.mxu0 0
    %161 = vmatpush.bf16.msra.mxu0 0
    %162 = vmatpush.bf16.msra.mxu0 0
    %163 = vmatpush.bf16.msra.mxu0 0
    %164 = vmatpush.bf16.msra.mxu0 0
    %165 = vmatpush.bf16.msra.mxu0 %v138
    %166 = vmatpush.bf16.msra.mxu0 %v118
    %167 = vmatmul.bf16.gmra.mxu0 %v131
    %v168 = vpop.f32.mrf.mxu0
    %v169 = vadd.f32 %v92, %v168
    %v170 = vpop.f32.mrf.mxu0
    %171 = vdwg.mxu0
    %172 = vmatpush.bf16.msra.mxu0 0
    %173 = vmatpush.bf16.msra.mxu0 0
    %174 = vmatpush.bf16.msra.mxu0 0
    %175 = vmatpush.bf16.msra.mxu0 0
    %176 = vmatpush.bf16.msra.mxu0 0
    %177 = vmatpush.bf16.msra.mxu0 0
    %178 = vmatpush.bf16.msra.mxu0 %v141
    %179 = vmatpush.bf16.msra.mxu0 %v119
    %180 = vmatmul.bf16.gmra.mxu0 %v131
    %v181 = vpop.f32.mrf.mxu0
    %v182 = vadd.f32 %v93, %v181
    %v183 = vpop.f32.mrf.mxu0
    %184 = vdwg.mxu0
    %185 = vmatpush.bf16.msra.mxu0 0
    %186 = vmatpush.bf16.msra.mxu0 0
    %187 = vmatpush.bf16.msra.mxu0 0
    %188 = vmatpush.bf16.msra.mxu0 0
    %189 = vmatpush.bf16.msra.mxu0 0
    %190 = vmatpush.bf16.msra.mxu0 0
    %191 = vmatpush.bf16.msra.mxu0 %v144
    %192 = vmatpush.bf16.msra.mxu0 %v120
    %193 = vmatmul.bf16.gmra.mxu0 %v131
    %v194 = vpop.f32.mrf.mxu0
    %v195 = vadd.f32 %v94, %v194
    %v196 = vpop.f32.mrf.mxu0
    %197 = vdwg.mxu0
    %v198 = vmax.f32 %v156, 0.0
    %v199 = vmax.f32 %v169, 0.0
    %v200 = vmax.f32 %v182, 0.0
    %v201 = vmax.f32 %v195, 0.0
    %v202 = vpack.c.bf16 %v198, %v198
    %v203 = vpack.c.bf16 %v199, %v199
    %v204 = vld [vmem:[#allocation7] sm:$0xff]
    %v205 = vld [vmem:[#allocation7 + $0x8] sm:$0xff]
    %v206 = vld [vmem:[#allocation7 + $0x10] sm:$0xff]
    %v207 = vld [vmem:[#allocation7 + $0x18] sm:$0xff]
    %v208 = vld [vmem:[#allocation7 + $0x20] sm:$0xff]
    %v209 = vld [vmem:[#allocation7 + $0x28] sm:$0xff]
    %v210 = vld [vmem:[#allocation7 + $0x30] sm:$0xff]
    %v211 = vld [vmem:[#allocation7 + $0x38] sm:$0xff]
    %v212 = vld [vmem:[#allocation7 + $0x40] sm:$0xff]
    %v213 = vld [vmem:[#allocation7 + $0x48] sm:$0xff]
    %v214 = vld [vmem:[#allocation7 + $0x50] sm:$0xff]
    %v215 = vld [vmem:[#allocation7 + $0x58] sm:$0xff]
    %v216 = vld [vmem:[#allocation7 + $0x60] sm:$0xff]
    %v217 = vld [vmem:[#allocation7 + $0x68] sm:$0xff]
    %v218 = vld [vmem:[#allocation7 + $0x70] sm:$0xff]
    %v219 = vld [vmem:[#allocation7 + $0x78] sm:$0xff]
    %v220 = vld [vmem:[#allocation7 + $0x80] sm:$0xff]
    %v221 = vld [vmem:[#allocation7 + $0x88] sm:$0xff]
    %v222 = vld [vmem:[#allocation7 + $0x90] sm:$0xff]
    %v223 = vld [vmem:[#allocation7 + $0x98] sm:$0xff]
    %v224 = vld [vmem:[#allocation7 + $0xa0] sm:$0xff]
    %v225 = vld [vmem:[#allocation7 + $0xa8] sm:$0xff]
    %v226 = vld [vmem:[#allocation7 + $0xb0] sm:$0xff]
    %v227 = vld [vmem:[#allocation7 + $0xb8] sm:$0xff]
    %v228 = vld [vmem:[#allocation7 + $0xc0] sm:$0xff]
    %v229 = vld [vmem:[#allocation7 + $0xc8] sm:$0xff]
    %v230 = vld [vmem:[#allocation7 + $0xd0] sm:$0xff]
    %v231 = vld [vmem:[#allocation7 + $0xd8] sm:$0xff]
    %v232 = vld [vmem:[#allocation7 + $0xe0] sm:$0xff]
    %v233 = vld [vmem:[#allocation7 + $0xe8] sm:$0xff]
    %v234 = vld [vmem:[#allocation7 + $0xf0] sm:$0xff]
    %v235 = vld [vmem:[#allocation7 + $0xf8] sm:$0xff]
    %s236 = scalar_lea.vmem [#allocation5], 1
    %v237 = vld [vmem:[%s236] ss:$2 sm:$0x3]
    %v239 = vperm.slane %v237, 0
    %v240 = vperm.slane %v237, 1
    %v275 = vunpack.c.l.b16 %v204
    %v276 = vunpack.c.h.b16 %v204
    %v277 = vunpack.c.l.b16 %v205
    %v278 = vunpack.c.h.b16 %v205
    %v279 = vunpack.c.l.b16 %v206
    %v280 = vunpack.c.h.b16 %v206
    %v281 = vunpack.c.l.b16 %v207
    %v282 = vunpack.c.h.b16 %v207
    %v283 = vunpack.c.l.b16 %v208
    %v284 = vunpack.c.h.b16 %v208
    %v285 = vunpack.c.l.b16 %v209
    %v286 = vunpack.c.h.b16 %v209
    %v287 = vunpack.c.l.b16 %v210
    %v288 = vunpack.c.h.b16 %v210
    %v289 = vunpack.c.l.b16 %v211
    %v290 = vunpack.c.h.b16 %v211
    %v291 = vunpack.c.l.b16 %v212
    %v292 = vunpack.c.h.b16 %v212
    %v293 = vunpack.c.l.b16 %v213
    %v294 = vunpack.c.h.b16 %v213
    %v295 = vunpack.c.l.b16 %v214
    %v296 = vunpack.c.h.b16 %v214
    %v297 = vunpack.c.l.b16 %v215
    %v298 = vunpack.c.h.b16 %v215
    %v299 = vunpack.c.l.b16 %v216
    %v300 = vunpack.c.h.b16 %v216
    %v301 = vunpack.c.l.b16 %v217
    %v302 = vunpack.c.h.b16 %v217
    %v303 = vunpack.c.l.b16 %v218
    %v304 = vunpack.c.h.b16 %v218
    %v305 = vunpack.c.l.b16 %v219
    %v306 = vunpack.c.h.b16 %v219
    %v307 = vunpack.c.l.b16 %v220
    %v308 = vunpack.c.h.b16 %v220
    %v309 = vunpack.c.l.b16 %v221
    %v310 = vunpack.c.h.b16 %v221
    %v311 = vunpack.c.l.b16 %v222
    %v312 = vunpack.c.h.b16 %v222
    %v313 = vunpack.c.l.b16 %v223
    %v314 = vunpack.c.h.b16 %v223
    %v315 = vunpack.c.l.b16 %v224
    %v316 = vunpack.c.h.b16 %v224
    %v317 = vunpack.c.l.b16 %v225
    %v318 = vunpack.c.h.b16 %v225
    %v319 = vunpack.c.l.b16 %v226
    %v320 = vunpack.c.h.b16 %v226
    %v321 = vunpack.c.l.b16 %v227
    %v322 = vunpack.c.h.b16 %v227
    %v323 = vunpack.c.l.b16 %v228
    %v324 = vunpack.c.h.b16 %v228
    %v325 = vunpack.c.l.b16 %v229
    %v326 = vunpack.c.h.b16 %v229
    %v327 = vunpack.c.l.b16 %v230
    %v328 = vunpack.c.h.b16 %v230
    %v329 = vunpack.c.l.b16 %v231
    %v330 = vunpack.c.h.b16 %v231
    %v331 = vunpack.c.l.b16 %v232
    %v332 = vunpack.c.h.b16 %v232
    %v333 = vunpack.c.l.b16 %v233
    %v334 = vunpack.c.h.b16 %v233
    %v335 = vunpack.c.l.b16 %v234
    %v336 = vunpack.c.h.b16 %v234
    %v337 = vunpack.c.l.b16 %v235
    %v338 = vunpack.c.h.b16 %v235
    %v339 = vpack.c.b16 %v277, %v275
    %v340 = vpack.c.b16 %v278, %v276
    %v341 = vpack.c.b16 %v281, %v279
    %v342 = vpack.c.b16 %v282, %v280
    %v343 = vpack.c.b16 %v285, %v283
    %v344 = vpack.c.b16 %v286, %v284
    %v345 = vpack.c.b16 %v289, %v287
    %v346 = vpack.c.b16 %v290, %v288
    %v347 = vpack.c.b16 %v293, %v291
    %v348 = vpack.c.b16 %v294, %v292
    %v349 = vpack.c.b16 %v297, %v295
    %v350 = vpack.c.b16 %v298, %v296
    %v351 = vpack.c.b16 %v301, %v299
    %v352 = vpack.c.b16 %v302, %v300
    %v353 = vpack.c.b16 %v305, %v303
    %v354 = vpack.c.b16 %v306, %v304
    %v355 = vpack.c.b16 %v309, %v307
    %v356 = vpack.c.b16 %v310, %v308
    %v357 = vpack.c.b16 %v313, %v311
    %v358 = vpack.c.b16 %v314, %v312
    %v359 = vpack.c.b16 %v317, %v315
    %v360 = vpack.c.b16 %v318, %v316
    %v361 = vpack.c.b16 %v321, %v319
    %v362 = vpack.c.b16 %v322, %v320
    %v363 = vpack.c.b16 %v325, %v323
    %v364 = vpack.c.b16 %v326, %v324
    %v365 = vpack.c.b16 %v329, %v327
    %v366 = vpack.c.b16 %v330, %v328
    %v367 = vpack.c.b16 %v333, %v331
    %v368 = vpack.c.b16 %v334, %v332
    %v369 = vpack.c.b16 %v337, %v335
    %v370 = vpack.c.b16 %v338, %v336
    %403 = vmatpush.bf16.msra.mxu0 %v353
    %404 = vmatpush.bf16.msra.mxu0 %v351
    %405 = vmatpush.bf16.msra.mxu0 %v349
    %406 = vmatpush.bf16.msra.mxu0 %v347
    %407 = vmatpush.bf16.msra.mxu0 %v345
    %408 = vmatpush.bf16.msra.mxu0 %v343
    %409 = vmatpush.bf16.msra.mxu0 %v341
    %410 = vmatpush.bf16.msra.mxu0 %v339
    %411 = vmatmul.bf16.gmra.mxu0 %v202
    %v412 = vpop.f32.mrf.mxu0
    %v413 = vadd.f32 %v239, %v412
    %v414 = vpop.f32.mrf.mxu0
    %415 = vdwg.mxu0
    %416 = vmatpush.bf16.msra.mxu0 %v369
    %417 = vmatpush.bf16.msra.mxu0 %v367
    %418 = vmatpush.bf16.msra.mxu0 %v365
    %419 = vmatpush.bf16.msra.mxu0 %v363
    %420 = vmatpush.bf16.msra.mxu0 %v361
    %421 = vmatpush.bf16.msra.mxu0 %v359
    %422 = vmatpush.bf16.msra.mxu0 %v357
    %423 = vmatpush.bf16.msra.mxu0 %v355
    %424 = vmatmul.bf16.gmra.mxu0 %v203
    %v425 = vpop.f32.mrf.mxu0
    %v426 = vadd.f32 %v413, %v425
    %v427 = vpop.f32.mrf.mxu0
    %428 = vdwg.mxu0
    %429 = vmatpush.bf16.msra.mxu0 %v354
    %430 = vmatpush.bf16.msra.mxu0 %v352
    %431 = vmatpush.bf16.msra.mxu0 %v350
    %432 = vmatpush.bf16.msra.mxu0 %v348
    %433 = vmatpush.bf16.msra.mxu0 %v346
    %434 = vmatpush.bf16.msra.mxu0 %v344
    %435 = vmatpush.bf16.msra.mxu0 %v342
    %436 = vmatpush.bf16.msra.mxu0 %v340
    %437 = vmatmul.bf16.gmra.mxu0 %v202
    %v438 = vpop.f32.mrf.mxu0
    %v439 = vadd.f32 %v240, %v438
    %v440 = vpop.f32.mrf.mxu0
    %441 = vdwg.mxu0
    %442 = vmatpush.bf16.msra.mxu0 %v370
    %443 = vmatpush.bf16.msra.mxu0 %v368
    %444 = vmatpush.bf16.msra.mxu0 %v366
    %445 = vmatpush.bf16.msra.mxu0 %v364
    %446 = vmatpush.bf16.msra.mxu0 %v362
    %447 = vmatpush.bf16.msra.mxu0 %v360
    %448 = vmatpush.bf16.msra.mxu0 %v358
    %449 = vmatpush.bf16.msra.mxu0 %v356
    %450 = vmatmul.bf16.gmra.mxu0 %v203
    %v451 = vpop.f32.mrf.mxu0
    %v452 = vadd.f32 %v439, %v451
    %v453 = vpop.f32.mrf.mxu0
    %454 = vdwg.mxu0
    %v455 = vmax.f32 %v426, 0.0
    %v456 = vmax.f32 %v452, 0.0
    %v457 = vld [vmem:[%s4] sm:$0x3]
    %v458 = vunpack.c.l.bf16 %v457
    %v460 = vperm.slane %v458, 0
    %v461 = vperm.slane %v458, 2
    %v464 = vperm.slane %v460, 0
    %v465 = vperm.slane %v461, 0
    %v466 = vmul.f32 %v455, %v464
    %v467 = vmul.f32 %v456, %v465
    %v468 = vadd.f32 %v466, %v467
    %469 = vadd.xlane.f32.xlu0 %v468
    %v470 = vpop.xlane.xlu0 %469
    %s471 = sld [smem:[#allocation8]]
    %v472 = vstv %s471
    %v473 = vadd.f32 %v470, %v472
    %v474 = vpack.c.bf16 %v200, %v200
    %v475 = vpack.c.bf16 %v201, %v201
    %s476 = scalar_lea.vmem [#allocation7], 256
    %v477 = vld [vmem:[%s476] sm:$0xff]
    %v478 = vld [vmem:[%s476 + $0x8] sm:$0xff]
    %v479 = vld [vmem:[%s476 + $0x10] sm:$0xff]
    %v480 = vld [vmem:[%s476 + $0x18] sm:$0xff]
    %v481 = vld [vmem:[%s476 + $0x20] sm:$0xff]
    %v482 = vld [vmem:[%s476 + $0x28] sm:$0xff]
    %v483 = vld [vmem:[%s476 + $0x30] sm:$0xff]
    %v484 = vld [vmem:[%s476 + $0x38] sm:$0xff]
    %v485 = vld [vmem:[%s476 + $0x40] sm:$0xff]
    %v486 = vld [vmem:[%s476 + $0x48] sm:$0xff]
    %v487 = vld [vmem:[%s476 + $0x50] sm:$0xff]
    %v488 = vld [vmem:[%s476 + $0x58] sm:$0xff]
    %v489 = vld [vmem:[%s476 + $0x60] sm:$0xff]
    %v490 = vld [vmem:[%s476 + $0x68] sm:$0xff]
    %v491 = vld [vmem:[%s476 + $0x70] sm:$0xff]
    %v492 = vld [vmem:[%s476 + $0x78] sm:$0xff]
    %v493 = vld [vmem:[%s476 + $0x80] sm:$0xff]
    %v494 = vld [vmem:[%s476 + $0x88] sm:$0xff]
    %v495 = vld [vmem:[%s476 + $0x90] sm:$0xff]
    %v496 = vld [vmem:[%s476 + $0x98] sm:$0xff]
    %v497 = vld [vmem:[%s476 + $0xa0] sm:$0xff]
    %v498 = vld [vmem:[%s476 + $0xa8] sm:$0xff]
    %v499 = vld [vmem:[%s476 + $0xb0] sm:$0xff]
    %v500 = vld [vmem:[%s476 + $0xb8] sm:$0xff]
    %v501 = vld [vmem:[%s476 + $0xc0] sm:$0xff]
    %v502 = vld [vmem:[%s476 + $0xc8] sm:$0xff]
    %v503 = vld [vmem:[%s476 + $0xd0] sm:$0xff]
    %v504 = vld [vmem:[%s476 + $0xd8] sm:$0xff]
    %v505 = vld [vmem:[%s476 + $0xe0] sm:$0xff]
    %v506 = vld [vmem:[%s476 + $0xe8] sm:$0xff]
    %v507 = vld [vmem:[%s476 + $0xf0] sm:$0xff]
    %v508 = vld [vmem:[%s476 + $0xf8] sm:$0xff]
    %s509 = scalar_lea.vmem [#allocation5], 5
    %v510 = vld [vmem:[%s509] ss:$2 sm:$0x3]
    %v512 = vperm.slane %v510, 0
    %v513 = vperm.slane %v510, 1
    %v548 = vunpack.c.l.b16 %v477
    %v549 = vunpack.c.h.b16 %v477
    %v550 = vunpack.c.l.b16 %v478
    %v551 = vunpack.c.h.b16 %v478
    %v552 = vunpack.c.l.b16 %v479
    %v553 = vunpack.c.h.b16 %v479
    %v554 = vunpack.c.l.b16 %v480
    %v555 = vunpack.c.h.b16 %v480
    %v556 = vunpack.c.l.b16 %v481
    %v557 = vunpack.c.h.b16 %v481
    %v558 = vunpack.c.l.b16 %v482
    %v559 = vunpack.c.h.b16 %v482
    %v560 = vunpack.c.l.b16 %v483
    %v561 = vunpack.c.h.b16 %v483
    %v562 = vunpack.c.l.b16 %v484
    %v563 = vunpack.c.h.b16 %v484
    %v564 = vunpack.c.l.b16 %v485
    %v565 = vunpack.c.h.b16 %v485
    %v566 = vunpack.c.l.b16 %v486
    %v567 = vunpack.c.h.b16 %v486
    %v568 = vunpack.c.l.b16 %v487
    %v569 = vunpack.c.h.b16 %v487
    %v570 = vunpack.c.l.b16 %v488
    %v571 = vunpack.c.h.b16 %v488
    %v572 = vunpack.c.l.b16 %v489
    %v573 = vunpack.c.h.b16 %v489
    %v574 = vunpack.c.l.b16 %v490
    %v575 = vunpack.c.h.b16 %v490
    %v576 = vunpack.c.l.b16 %v491
    %v577 = vunpack.c.h.b16 %v491
    %v578 = vunpack.c.l.b16 %v492
    %v579 = vunpack.c.h.b16 %v492
    %v580 = vunpack.c.l.b16 %v493
    %v581 = vunpack.c.h.b16 %v493
    %v582 = vunpack.c.l.b16 %v494
    %v583 = vunpack.c.h.b16 %v494
    %v584 = vunpack.c.l.b16 %v495
    %v585 = vunpack.c.h.b16 %v495
    %v586 = vunpack.c.l.b16 %v496
    %v587 = vunpack.c.h.b16 %v496
    %v588 = vunpack.c.l.b16 %v497
    %v589 = vunpack.c.h.b16 %v497
    %v590 = vunpack.c.l.b16 %v498
    %v591 = vunpack.c.h.b16 %v498
    %v592 = vunpack.c.l.b16 %v499
    %v593 = vunpack.c.h.b16 %v499
    %v594 = vunpack.c.l.b16 %v500
    %v595 = vunpack.c.h.b16 %v500
    %v596 = vunpack.c.l.b16 %v501
    %v597 = vunpack.c.h.b16 %v501
    %v598 = vunpack.c.l.b16 %v502
    %v599 = vunpack.c.h.b16 %v502
    %v600 = vunpack.c.l.b16 %v503
    %v601 = vunpack.c.h.b16 %v503
    %v602 = vunpack.c.l.b16 %v504
    %v603 = vunpack.c.h.b16 %v504
    %v604 = vunpack.c.l.b16 %v505
    %v605 = vunpack.c.h.b16 %v505
    %v606 = vunpack.c.l.b16 %v506
    %v607 = vunpack.c.h.b16 %v506
    %v608 = vunpack.c.l.b16 %v507
    %v609 = vunpack.c.h.b16 %v507
    %v610 = vunpack.c.l.b16 %v508
    %v611 = vunpack.c.h.b16 %v508
    %v612 = vpack.c.b16 %v550, %v548
    %v613 = vpack.c.b16 %v551, %v549
    %v614 = vpack.c.b16 %v554, %v552
    %v615 = vpack.c.b16 %v555, %v553
    %v616 = vpack.c.b16 %v558, %v556
    %v617 = vpack.c.b16 %v559, %v557
    %v618 = vpack.c.b16 %v562, %v560
    %v619 = vpack.c.b16 %v563, %v561
    %v620 = vpack.c.b16 %v566, %v564
    %v621 = vpack.c.b16 %v567, %v565
    %v622 = vpack.c.b16 %v570, %v568
    %v623 = vpack.c.b16 %v571, %v569
    %v624 = vpack.c.b16 %v574, %v572
    %v625 = vpack.c.b16 %v575, %v573
    %v626 = vpack.c.b16 %v578, %v576
    %v627 = vpack.c.b16 %v579, %v577
    %v628 = vpack.c.b16 %v582, %v580
    %v629 = vpack.c.b16 %v583, %v581
    %v630 = vpack.c.b16 %v586, %v584
    %v631 = vpack.c.b16 %v587, %v585
    %v632 = vpack.c.b16 %v590, %v588
    %v633 = vpack.c.b16 %v591, %v589
    %v634 = vpack.c.b16 %v594, %v592
    %v635 = vpack.c.b16 %v595, %v593
    %v636 = vpack.c.b16 %v598, %v596
    %v637 = vpack.c.b16 %v599, %v597
    %v638 = vpack.c.b16 %v602, %v600
    %v639 = vpack.c.b16 %v603, %v601
    %v640 = vpack.c.b16 %v606, %v604
    %v641 = vpack.c.b16 %v607, %v605
    %v642 = vpack.c.b16 %v610, %v608
    %v643 = vpack.c.b16 %v611, %v609
    %676 = vmatpush.bf16.msra.mxu0 %v626
    %677 = vmatpush.bf16.msra.mxu0 %v624
    %678 = vmatpush.bf16.msra.mxu0 %v622
    %679 = vmatpush.bf16.msra.mxu0 %v620
    %680 = vmatpush.bf16.msra.mxu0 %v618
    %681 = vmatpush.bf16.msra.mxu0 %v616
    %682 = vmatpush.bf16.msra.mxu0 %v614
    %683 = vmatpush.bf16.msra.mxu0 %v612
    %684 = vmatmul.bf16.gmra.mxu0 %v474
    %v685 = vpop.f32.mrf.mxu0
    %v686 = vadd.f32 %v512, %v685
    %v687 = vpop.f32.mrf.mxu0
    %688 = vdwg.mxu0
    %689 = vmatpush.bf16.msra.mxu0 %v642
    %690 = vmatpush.bf16.msra.mxu0 %v640
    %691 = vmatpush.bf16.msra.mxu0 %v638
    %692 = vmatpush.bf16.msra.mxu0 %v636
    %693 = vmatpush.bf16.msra.mxu0 %v634
    %694 = vmatpush.bf16.msra.mxu0 %v632
    %695 = vmatpush.bf16.msra.mxu0 %v630
    %696 = vmatpush.bf16.msra.mxu0 %v628
    %697 = vmatmul.bf16.gmra.mxu0 %v475
    %v698 = vpop.f32.mrf.mxu0
    %v699 = vadd.f32 %v686, %v698
    %v700 = vpop.f32.mrf.mxu0
    %701 = vdwg.mxu0
    %702 = vmatpush.bf16.msra.mxu0 %v627
    %703 = vmatpush.bf16.msra.mxu0 %v625
    %704 = vmatpush.bf16.msra.mxu0 %v623
    %705 = vmatpush.bf16.msra.mxu0 %v621
    %706 = vmatpush.bf16.msra.mxu0 %v619
    %707 = vmatpush.bf16.msra.mxu0 %v617
    %708 = vmatpush.bf16.msra.mxu0 %v615
    %709 = vmatpush.bf16.msra.mxu0 %v613
    %710 = vmatmul.bf16.gmra.mxu0 %v474
    %v711 = vpop.f32.mrf.mxu0
    %v712 = vadd.f32 %v513, %v711
    %v713 = vpop.f32.mrf.mxu0
    %714 = vdwg.mxu0
    %715 = vmatpush.bf16.msra.mxu0 %v643
    %716 = vmatpush.bf16.msra.mxu0 %v641
    %717 = vmatpush.bf16.msra.mxu0 %v639
    %718 = vmatpush.bf16.msra.mxu0 %v637
    %719 = vmatpush.bf16.msra.mxu0 %v635
    %720 = vmatpush.bf16.msra.mxu0 %v633
    %721 = vmatpush.bf16.msra.mxu0 %v631
    %722 = vmatpush.bf16.msra.mxu0 %v629
    %723 = vmatmul.bf16.gmra.mxu0 %v475
    %v724 = vpop.f32.mrf.mxu0
    %v725 = vadd.f32 %v712, %v724
    %v726 = vpop.f32.mrf.mxu0
    %727 = vdwg.mxu0
    %v728 = vmax.f32 %v699, 0.0
    %v729 = vmax.f32 %v725, 0.0
    %s730 = scalar_lea.vmem %s4, 2
    %v731 = vld [vmem:[%s730] sm:$0x3]
    %v732 = vunpack.c.l.bf16 %v731
    %v734 = vperm.slane %v732, 0
    %v735 = vperm.slane %v732, 2
    %v738 = vperm.slane %v734, 0
    %v739 = vperm.slane %v735, 0
    %v740 = vmul.f32 %v728, %v738
    %v741 = vmul.f32 %v729, %v739
    %v742 = vadd.f32 %v740, %v741
    %743 = vadd.xlane.f32.xlu0 %v742
    %v744 = vpop.xlane.xlu0 %743
    %s745 = sld [smem:[#allocation8 + $0x1]]
    %v746 = vstv %s745
    %v747 = vadd.f32 %v744, %v746
    %v748 = vadd.f32 %v473, %v747
    %v749 = vmul.f32 %v748, 0.5
    %v750 = vsub.f32 %v473, %v749
    %v751 = vmul.f32 %v750, %v750
    %v752 = vsub.f32 %v747, %v749
    %v753 = vmul.f32 %v752, %v752
    %v754 = vadd.f32 %v751, %v753
    %v755 = vrsqrt.pop %v754
    %v756 = vmul.f32 %v755, %v754
    %v757 = vmul.f32 %v756, %v755
    %v758 = vmul.f32 0.5, %v757
    %v759 = vsub.f32 1.5, %v758
    %v760 = vmul.f32 %v755, %v759
    %v761 = vmul.f32 %v754, %v760
    %vm762 = vcmp.eq.f32.partialorder %v754, inf
    %v763 = vsel %vm762, %v754, %v761
    %vm764 = vcmp.eq.f32.partialorder %v754, 0.0
    %v765 = vand.u32 %v754, 2147483648
    %v766 = vsel %vm764, %v765, %v763
    %vm767 = vcmask 7168
    %v768 = vsel %vm767, %v749, %v766
    %vm769 = vcmask 15360
    %770 = vst.msk [vmem:[%s6] sm:$0xff] %vm769, %v768
    // Predicated region
    $region42: #{tpu_custom_call.1} parent=1 // pred_check
      _
    $region43: #{tpu_custom_call.1} parent=1 // pred_check_branch
      %772 = sbr.rel (0) target = $region45
    $region44: #{tpu_custom_call.1} parent=1 // pred_region
      _
    $region45: #{tpu_custom_call.1} parent=1 // pred_fallthru
      _
    // Predicated region
    $region46: #{tpu_custom_call.1} parent=1 // pred_check
      _
    $region47: #{tpu_custom_call.1} parent=1 // pred_check_branch
      %774 = sbr.rel (0) target = $region49
    $region48: #{tpu_custom_call.1} parent=1 // pred_region
      _
    $region49: #{tpu_custom_call.1} parent=1 // pred_fallthru
      _
    %775 = vsyncpa [#allocation3], 1
    %776 = vsyncpa [#allocation6], 1
    %777 = vsyncpa [#allocation4], 1

</llo_original>
